<compile_context>
chip_gen: v7x
topology: tpu7x:2x2x1
jax: 0.10.0
libtpu: 0.0.40
codegen_flags: <defaults>
</compile_context>

<pallas_src>
import math
import functools

import jax
import jax.numpy as jnp
from jax.experimental import pallas as pl
from jax.experimental.pallas import tpu as pltpu


def _round_up(x, m):
    return ((x + m - 1) // m) * m


# --------------------------------------------------------------------------
# Fast path: sq == 1 and sk == 1 (the module's documented configuration).
# Softmax over a single key is exactly 1, so attention output == V projection;
# Q/K projections do not affect the output and are skipped (exact identity).
# Batch is folded into the matmul M dimension (block of TB rows per grid step).
# --------------------------------------------------------------------------
def _tsa_decode_kernel(q_ref, kv_ref, wv_ref, bv_ref, wo_ref, bo_ref,
                       gamma_ref, beta_ref, o_ref):
    x = q_ref[...].astype(jnp.float32)     # (TB, E) query row == residual bypass
    kv = kv_ref[...].astype(jnp.float32)   # (TB, E) prev_embed row (key==value src)

    # attention output for a single key == value projection (softmax weight == 1)
    v = jnp.dot(kv, wv_ref[...], preferred_element_type=jnp.float32) + bv_ref[...]

    # output projection + residual
    out = jnp.dot(v, wo_ref[...], preferred_element_type=jnp.float32) + bo_ref[...]
    y = out + x

    # LayerNorm over embed dim (biased variance, eps=1e-5), affine.
    mean = jnp.mean(y, axis=-1, keepdims=True)
    var = jnp.mean((y - mean) ** 2, axis=-1, keepdims=True)
    y = (y - mean) * jax.lax.rsqrt(var + 1e-5)
    y = y * gamma_ref[...] + beta_ref[...]

    o_ref[...] = y.astype(o_ref.dtype)


# --------------------------------------------------------------------------
# General fallback: sq > 1 or sk > 1.  Per-batch grid, fused K/V projection.
# TODO(synk): flash-style kv-sequence tiling (online softmax) for long
#             prev_embed sequences / very large embed dims (v7x 64MiB VMEM).
# --------------------------------------------------------------------------
def _tsa_general_kernel(q_ref, kv_ref, wq_ref, bq_ref, wkv_ref, bkv_ref,
                        wo_ref, bo_ref, gamma_ref, beta_ref, o_ref,
                        *, num_heads, head_dim):
    x = q_ref[0].astype(jnp.float32)     # (Sq, E)
    kv = kv_ref[0].astype(jnp.float32)   # (Sk, E)
    e = x.shape[-1]

    q = jnp.dot(x, wq_ref[...], preferred_element_type=jnp.float32) + bq_ref[...]
    kvp = jnp.dot(kv, wkv_ref[...], preferred_element_type=jnp.float32) + bkv_ref[...]
    k = kvp[:, :e]
    v = kvp[:, e:]

    scale = 1.0 / math.sqrt(head_dim)

    head_outs = []
    for h in range(num_heads):
        lo = h * head_dim
        qh = q[:, lo:lo + head_dim]   # (Sq, Dh)
        kh = k[:, lo:lo + head_dim]   # (Sk, Dh)
        vh = v[:, lo:lo + head_dim]   # (Sk, Dh)
        s = jax.lax.dot_general(
            qh, kh,
            dimension_numbers=(((1,), (1,)), ((), ())),
            preferred_element_type=jnp.float32) * scale     # (Sq, Sk)
        m = jnp.max(s, axis=-1, keepdims=True)
        p = jnp.exp(s - m)
        p = p * pl.reciprocal(jnp.sum(p, axis=-1, keepdims=True), approx=False)
        head_outs.append(jnp.dot(p, vh, preferred_element_type=jnp.float32))
    attn = jnp.concatenate(head_outs, axis=-1)               # (Sq, E)

    out = jnp.dot(attn, wo_ref[...], preferred_element_type=jnp.float32) + bo_ref[...]
    y = out + x

    mean = jnp.mean(y, axis=-1, keepdims=True)
    var = jnp.mean((y - mean) ** 2, axis=-1, keepdims=True)
    y = (y - mean) * jax.lax.rsqrt(var + 1e-5)
    y = y * gamma_ref[...] + beta_ref[...]

    o_ref[0] = y.astype(o_ref.dtype)


def tsa_forward(query, prev_embed, params, *, num_heads, block_batch=None):
    """query, prev_embed: [bs, seq, embed] float32."""
    if prev_embed is None:
        prev_embed = query
    bs, sq, e = query.shape
    _, sk, _ = prev_embed.shape
    head_dim = e // num_heads

    compiler_params = pltpu.CompilerParams(
        dimension_semantics=("parallel",),
        vmem_limit_bytes=64 * 1024 * 1024,
    )
    const2d = lambda i: (0, 0)   # un-tiled weights/biases, loaded whole

    if sq == 1 and sk == 1:
        # ---------------- batch-folded decode fast path ----------------
        if block_batch is None:
            tb = min(256, _round_up(bs, 8))
        else:
            tb = block_batch
        tb = max(8, _round_up(tb, 8))
        bs_p = _round_up(bs, tb)

        q2 = query.reshape(bs, e)
        kv2 = prev_embed.reshape(bs, e)
        if bs_p != bs:
            pad = bs_p - bs
            q2 = jnp.pad(q2, ((0, pad), (0, 0)))
            kv2 = jnp.pad(kv2, ((0, pad), (0, 0)))

        out2 = pl.pallas_call(
            _tsa_decode_kernel,
            out_shape=jax.ShapeDtypeStruct((bs_p, e), query.dtype),
            grid_spec=pltpu.PrefetchScalarGridSpec(
                num_scalar_prefetch=0,
                grid=(bs_p // tb,),
                in_specs=[
                    pl.BlockSpec((tb, e), lambda i: (i, 0)),   # query rows
                    pl.BlockSpec((tb, e), lambda i: (i, 0)),   # prev_embed rows
                    pl.BlockSpec((e, e), const2d),             # Wv
                    pl.BlockSpec((1, e), const2d),             # bv
                    pl.BlockSpec((e, e), const2d),             # Wo
                    pl.BlockSpec((1, e), const2d),             # bo
                    pl.BlockSpec((1, e), const2d),             # ln gamma
                    pl.BlockSpec((1, e), const2d),             # ln beta
                ],
                out_specs=pl.BlockSpec((tb, e), lambda i: (i, 0)),
            ),
            compiler_params=compiler_params,
        )(q2, kv2,
          params["wv"], params["bv"],
          params["wo"], params["bo"],
          params["ln_gamma"], params["ln_beta"])
        return out2[:bs].reshape(bs, 1, e)

    # ---------------- general fallback (sq > 1 or sk > 1) ----------------
    wkv = jnp.concatenate([params["wk"], params["wv"]], axis=1)   # (E, 2E)
    bkv = jnp.concatenate([params["bk"], params["bv"]], axis=1)   # (1, 2E)
    kernel = functools.partial(_tsa_general_kernel,
                               num_heads=num_heads, head_dim=head_dim)
    return pl.pallas_call(
        kernel,
        out_shape=jax.ShapeDtypeStruct((bs, sq, e), query.dtype),
        grid_spec=pltpu.PrefetchScalarGridSpec(
            num_scalar_prefetch=0,
            grid=(bs,),
            in_specs=[
                pl.BlockSpec((1, sq, e), lambda b: (b, 0, 0)),   # query
                pl.BlockSpec((1, sk, e), lambda b: (b, 0, 0)),   # prev_embed
                pl.BlockSpec((e, e), const2d),                   # Wq
                pl.BlockSpec((1, e), const2d),                   # bq
                pl.BlockSpec((e, 2 * e), const2d),               # Wkv (fused K|V)
                pl.BlockSpec((1, 2 * e), const2d),               # bkv
                pl.BlockSpec((e, e), const2d),                   # Wo
                pl.BlockSpec((1, e), const2d),                   # bo
                pl.BlockSpec((1, e), const2d),                   # ln gamma
                pl.BlockSpec((1, e), const2d),                   # ln beta
            ],
            out_specs=pl.BlockSpec((1, sq, e), lambda b: (b, 0, 0)),
        ),
        compiler_params=compiler_params,
    )(query, prev_embed,
      params["wq"], params["bq"], wkv, bkv,
      params["wo"], params["bo"],
      params["ln_gamma"], params["ln_beta"])


def ref_tsa(query, prev_embed, params, *, num_heads):
    """Pure-JAX reference mirroring torch.nn.MultiheadAttention (eval) + LayerNorm."""
    if prev_embed is None:
        prev_embed = query
    bs, sq, e = query.shape
    dh = e // num_heads
    q = query @ params["wq"] + params["bq"]
    k = prev_embed @ params["wk"] + params["bk"]
    v = prev_embed @ params["wv"] + params["bv"]
    q = q.reshape(bs, sq, num_heads, dh).transpose(0, 2, 1, 3)
    k = k.reshape(bs, -1, num_heads, dh).transpose(0, 2, 1, 3)
    v = v.reshape(bs, -1, num_heads, dh).transpose(0, 2, 1, 3)
    s = jnp.einsum("bhqd,bhkd->bhqk", q, k) / math.sqrt(dh)
    p = jax.nn.softmax(s, axis=-1)
    o = jnp.einsum("bhqk,bhkd->bhqd", p, v).transpose(0, 2, 1, 3).reshape(bs, sq, e)
    o = o @ params["wo"] + params["bo"]
    y = o + query
    mean = jnp.mean(y, axis=-1, keepdims=True)
    var = jnp.mean((y - mean) ** 2, axis=-1, keepdims=True)
    y = (y - mean) / jnp.sqrt(var + 1e-5)
    return y * params["ln_gamma"] + params["ln_beta"]


if __name__ == "__main__":
    # Small shapes consistent with the module's forward (query: [bs, 1, embed]).
    BS, EMBED, HEADS = 12, 128, 4

    key = jax.random.PRNGKey(0)
    ks = jax.random.split(key, 10)
    scale = 1.0 / math.sqrt(EMBED)
    params = {
        # weights pre-transposed to [E_in, E_out] so the kernel does x @ W
        "wq": jax.random.normal(ks[0], (EMBED, EMBED), jnp.float32) * scale,
        "wk": jax.random.normal(ks[1], (EMBED, EMBED), jnp.float32) * scale,
        "wv": jax.random.normal(ks[2], (EMBED, EMBED), jnp.float32) * scale,
        "wo": jax.random.normal(ks[3], (EMBED, EMBED), jnp.float32) * scale,
        "bq": jax.random.normal(ks[4], (1, EMBED), jnp.float32) * 0.02,
        "bk": jax.random.normal(ks[5], (1, EMBED), jnp.float32) * 0.02,
        "bv": jax.random.normal(ks[6], (1, EMBED), jnp.float32) * 0.02,
        "bo": jnp.zeros((1, EMBED), jnp.float32),
        "ln_gamma": jnp.ones((1, EMBED), jnp.float32),
        "ln_beta": jnp.zeros((1, EMBED), jnp.float32),
    }

    query = jax.random.normal(ks[7], (BS, 1, EMBED), jnp.float32)
    prev_embed = jax.random.normal(ks[8], (BS, 1, EMBED), jnp.float32)

    # NOTE: dropout=0.1 in the PyTorch module is a no-op at inference; not applied here.

    # 1) Decode fast path, multi-step grid (block_batch=8 -> grid=2, batch padded 12->16).
    out = jax.block_until_ready(
        tsa_forward(query, prev_embed, params, num_heads=HEADS, block_batch=8))
    ref = ref_tsa(query, prev_embed, params, num_heads=HEADS)
    assert out.shape == (BS, 1, EMBED)
    assert jnp.allclose(out, ref, atol=1e-4, rtol=1e-4), "mismatch vs reference (fast path)"

    # 2) prev_embed=None path (self-attention on query), default batch tile.
    out2 = jax.block_until_ready(tsa_forward(query, None, params, num_heads=HEADS))
    ref2 = ref_tsa(query, None, params, num_heads=HEADS)
    assert jnp.allclose(out2, ref2, atol=1e-4, rtol=1e-4), "mismatch vs reference (None path)"

    # 3) General fallback path (sk > 1) stays correct.
    prev_long = jax.random.normal(ks[9], (BS, 4, EMBED), jnp.float32)
    out3 = jax.block_until_ready(tsa_forward(query, prev_long, params, num_heads=HEADS))
    ref3 = ref_tsa(query, prev_long, params, num_heads=HEADS)
    assert jnp.allclose(out3, ref3, atol=1e-4, rtol=1e-4), "mismatch vs reference (sk>1 path)"

    print("KERNEL_OK")
</pallas_src>

<mosaic_0001>
module attributes {stable_mosaic.version = 11 : i64} {
  func.func @_tsa_decode_kernel(%arg0: i32, %arg1: memref<8x128xf32, #tpu.memory_space<vmem>>, %arg2: memref<8x128xf32, #tpu.memory_space<vmem>>, %arg3: memref<128x128xf32, #tpu.memory_space<vmem>>, %arg4: memref<1x128xf32, #tpu.memory_space<vmem>>, %arg5: memref<128x128xf32, #tpu.memory_space<vmem>>, %arg6: memref<1x128xf32, #tpu.memory_space<vmem>>, %arg7: memref<1x128xf32, #tpu.memory_space<vmem>>, %arg8: memref<1x128xf32, #tpu.memory_space<vmem>>, %arg9: memref<8x128xf32, #tpu.memory_space<vmem>>) attributes {dimension_semantics = [#tpu.dimension_semantics<parallel>], iteration_bounds = array<i64: 2>, scalar_prefetch = 0 : i64, scratch_operands = 0 : i64, tpu.core_type = #tpu.core_type<tc>, window_params = [{transform_indices = @transform_0, window_bounds = array<i64: 8, 128>}, {transform_indices = @transform_1, window_bounds = array<i64: 8, 128>}, {pipeline_mode = #tpu.pipeline_mode<synchronous>, transform_indices = @transform_2, window_bounds = array<i64: 128, 128>}, {pipeline_mode = #tpu.pipeline_mode<synchronous>, transform_indices = @transform_3, window_bounds = array<i64: 1, 128>}, {pipeline_mode = #tpu.pipeline_mode<synchronous>, transform_indices = @transform_4, window_bounds = array<i64: 128, 128>}, {pipeline_mode = #tpu.pipeline_mode<synchronous>, transform_indices = @transform_5, window_bounds = array<i64: 1, 128>}, {pipeline_mode = #tpu.pipeline_mode<synchronous>, transform_indices = @transform_6, window_bounds = array<i64: 1, 128>}, {pipeline_mode = #tpu.pipeline_mode<synchronous>, transform_indices = @transform_7, window_bounds = array<i64: 1, 128>}, {transform_indices = @transform_8, window_bounds = array<i64: 8, 128>}]} {
    %c0 = arith.constant 0 : index
    %c0_0 = arith.constant 0 : index
    %0 = vector.load %arg1[%c0, %c0_0] : memref<8x128xf32, #tpu.memory_space<vmem>>, vector<8x128xf32>
    %c0_1 = arith.constant 0 : index
    %c0_2 = arith.constant 0 : index
    %1 = vector.load %arg2[%c0_1, %c0_2] : memref<8x128xf32, #tpu.memory_space<vmem>>, vector<8x128xf32>
    %c0_3 = arith.constant 0 : index
    %c0_4 = arith.constant 0 : index
    %2 = vector.load %arg3[%c0_3, %c0_4] : memref<128x128xf32, #tpu.memory_space<vmem>>, vector<128x128xf32>
    %cst = arith.constant dense<0.000000e+00> : vector<8x128xf32>
    %3 = tpu.matmul %1, %2, %cst {dimension_numbers = #tpu.dot_dimension_numbers<[1], [0], [0], [1], [0, 0, 1, 1], [], []>} : vector<8x128xf32>, vector<128x128xf32>, vector<8x128xf32> -> vector<8x128xf32>
    %c0_5 = arith.constant 0 : index
    %c0_6 = arith.constant 0 : index
    %4 = vector.load %arg4[%c0_5, %c0_6] : memref<1x128xf32, #tpu.memory_space<vmem>>, vector<1x128xf32>
    %5 = vector.broadcast %4 : vector<1x128xf32> to vector<8x128xf32>
    %6 = arith.addf %3, %5 : vector<8x128xf32>
    %c0_7 = arith.constant 0 : index
    %c0_8 = arith.constant 0 : index
    %7 = vector.load %arg5[%c0_7, %c0_8] : memref<128x128xf32, #tpu.memory_space<vmem>>, vector<128x128xf32>
    %cst_9 = arith.constant dense<0.000000e+00> : vector<8x128xf32>
    %8 = tpu.matmul %6, %7, %cst_9 {dimension_numbers = #tpu.dot_dimension_numbers<[1], [0], [0], [1], [0, 0, 1, 1], [], []>} : vector<8x128xf32>, vector<128x128xf32>, vector<8x128xf32> -> vector<8x128xf32>
    %c0_10 = arith.constant 0 : index
    %c0_11 = arith.constant 0 : index
    %9 = vector.load %arg6[%c0_10, %c0_11] : memref<1x128xf32, #tpu.memory_space<vmem>>, vector<1x128xf32>
    %10 = vector.broadcast %9 : vector<1x128xf32> to vector<8x128xf32>
    %11 = arith.addf %8, %10 : vector<8x128xf32>
    %12 = arith.addf %11, %0 : vector<8x128xf32>
    %cst_12 = arith.constant dense<0.000000e+00> : vector<8xf32>
    %13 = vector.multi_reduction <add>, %12, %cst_12 [1] : vector<8x128xf32> to vector<8xf32>
    %14 = vector.shape_cast %13 : vector<8xf32> to vector<8x1xf32>
    %cst_13 = arith.constant 1.280000e+02 : f32
    %15 = vector.broadcast %cst_13 : f32 to vector<8x1xf32>
    %16 = arith.divf %14, %15 : vector<8x1xf32>
    %17 = vector.broadcast %16 : vector<8x1xf32> to vector<8x128xf32>
    %18 = arith.subf %12, %17 : vector<8x128xf32>
    %19 = arith.mulf %18, %18 : vector<8x128xf32>
    %cst_14 = arith.constant dense<0.000000e+00> : vector<8xf32>
    %20 = vector.multi_reduction <add>, %19, %cst_14 [1] : vector<8x128xf32> to vector<8xf32>
    %21 = vector.shape_cast %20 : vector<8xf32> to vector<8x1xf32>
    %cst_15 = arith.constant 1.280000e+02 : f32
    %22 = vector.broadcast %cst_15 : f32 to vector<8x1xf32>
    %23 = arith.divf %21, %22 : vector<8x1xf32>
    %24 = vector.broadcast %16 : vector<8x1xf32> to vector<8x128xf32>
    %25 = arith.subf %12, %24 : vector<8x128xf32>
    %cst_16 = arith.constant 9.99999974E-6 : f32
    %26 = vector.broadcast %cst_16 : f32 to vector<8x1xf32>
    %27 = arith.addf %23, %26 : vector<8x1xf32>
    %28 = math.rsqrt %27 : vector<8x1xf32>
    %29 = vector.broadcast %28 : vector<8x1xf32> to vector<8x128xf32>
    %30 = arith.mulf %25, %29 : vector<8x128xf32>
    %c0_17 = arith.constant 0 : index
    %c0_18 = arith.constant 0 : index
    %31 = vector.load %arg7[%c0_17, %c0_18] : memref<1x128xf32, #tpu.memory_space<vmem>>, vector<1x128xf32>
    %32 = vector.broadcast %31 : vector<1x128xf32> to vector<8x128xf32>
    %33 = arith.mulf %30, %32 : vector<8x128xf32>
    %c0_19 = arith.constant 0 : index
    %c0_20 = arith.constant 0 : index
    %34 = vector.load %arg8[%c0_19, %c0_20] : memref<1x128xf32, #tpu.memory_space<vmem>>, vector<1x128xf32>
    %35 = vector.broadcast %34 : vector<1x128xf32> to vector<8x128xf32>
    %36 = arith.addf %33, %35 : vector<8x128xf32>
    %c0_21 = arith.constant 0 : index
    %c0_22 = arith.constant 0 : index
    %37 = vector.load %arg9[%c0_21, %c0_22] : memref<8x128xf32, #tpu.memory_space<vmem>>, vector<8x128xf32>
    tpu.vector_store %arg9[%c0_21, %c0_22], %36 {strides = array<i32>} : memref<8x128xf32, #tpu.memory_space<vmem>>, vector<8x128xf32>,
    return
  }
  func.func @transform_0(%arg0: i32) -> (i32, i32) {
    %c0_i32 = arith.constant 0 : i32
    %c0_i32_0 = arith.constant 0 : i32
    return %arg0, %c0_i32 : i32, i32
  }
  func.func @transform_1(%arg0: i32) -> (i32, i32) {
    %c0_i32 = arith.constant 0 : i32
    %c0_i32_0 = arith.constant 0 : i32
    return %arg0, %c0_i32 : i32, i32
  }
  func.func @transform_2(%arg0: i32) -> (i32, i32) {
    %c0_i32 = arith.constant 0 : i32
    %c0_i32_0 = arith.constant 0 : i32
    %c0_i32_1 = arith.constant 0 : i32
    return %c0_i32, %c0_i32_0 : i32, i32
  }
  func.func @transform_3(%arg0: i32) -> (i32, i32) {
    %c0_i32 = arith.constant 0 : i32
    %c0_i32_0 = arith.constant 0 : i32
    %c0_i32_1 = arith.constant 0 : i32
    return %c0_i32, %c0_i32_0 : i32, i32
  }
  func.func @transform_4(%arg0: i32) -> (i32, i32) {
    %c0_i32 = arith.constant 0 : i32
    %c0_i32_0 = arith.constant 0 : i32
    %c0_i32_1 = arith.constant 0 : i32
    return %c0_i32, %c0_i32_0 : i32, i32
  }
  func.func @transform_5(%arg0: i32) -> (i32, i32) {
    %c0_i32 = arith.constant 0 : i32
    %c0_i32_0 = arith.constant 0 : i32
    %c0_i32_1 = arith.constant 0 : i32
    return %c0_i32, %c0_i32_0 : i32, i32
  }
  func.func @transform_6(%arg0: i32) -> (i32, i32) {
    %c0_i32 = arith.constant 0 : i32
    %c0_i32_0 = arith.constant 0 : i32
    %c0_i32_1 = arith.constant 0 : i32
    return %c0_i32, %c0_i32_0 : i32, i32
  }
  func.func @transform_7(%arg0: i32) -> (i32, i32) {
    %c0_i32 = arith.constant 0 : i32
    %c0_i32_0 = arith.constant 0 : i32
    %c0_i32_1 = arith.constant 0 : i32
    return %c0_i32, %c0_i32_0 : i32, i32
  }
  func.func @transform_8(%arg0: i32) -> (i32, i32) {
    %c0_i32 = arith.constant 0 : i32
    %c0_i32_0 = arith.constant 0 : i32
    return %arg0, %c0_i32 : i32, i32
  }
}

</mosaic_0001>

<llo_original>
// kernel: tpu_custom_call.1
$region0: #{tpu_custom_call.1}
  #allocation0 [shape = 'u32[]', space=smem, size = 0x4, offset = 0x4, fixed_abs, tag = 'smem constant byte address 0x4 - core index']
  #allocation1 [shape = 'u32[144,128]{1,0:T(1,128)}', space=vmem, size = 0x12000, scoped, tag = 'internal scratch']
  %s0 = inlined_call_operand.hbm [shape: f32[16,128], index: 0, kind: input, shape index: {}]
  %s1 = inlined_call_operand.hbm [shape: f32[16,128], index: 1, kind: input, shape index: {}]
  %s2 = inlined_call_operand.hbm [shape: f32[128,128], index: 2, kind: input, shape index: {}]
  %s3 = inlined_call_operand.hbm [shape: f32[1,128], index: 3, kind: input, shape index: {}]
  %s4 = inlined_call_operand.hbm [shape: f32[128,128], index: 4, kind: input, shape index: {}]
  %s5 = inlined_call_operand.hbm [shape: f32[1,128], index: 5, kind: input, shape index: {}]
  %s6 = inlined_call_operand.hbm [shape: f32[1,128], index: 6, kind: input, shape index: {}]
  %s7 = inlined_call_operand.hbm [shape: f32[1,128], index: 7, kind: input, shape index: {}]
  %s8 = inlined_call_operand.hbm [shape: f32[16,128], index: 8, kind: output, shape index: {}]
  %s9 = sld [smem:[#allocation0]]
  $region97: #{tpu_custom_call.1} parent=0
    _
  %s11 = ssub.s32 1, %s9
  %s12 = scalar_select 0, %s11, %s9
  $region1: #{tpu_custom_call.1} parent=0
    #allocation2 [shape = 'u8[8192]{0}', space=vmem, size = 0x2000, scoped, tag = 'input window, operand 0']
    #allocation3 [shape = 's32[2]{0}', space=sflag, size = 0x8, scoped, tag = 'scoped memory for tpu_custom_call.1']
    #allocation4 [shape = 's32[2]{0}', space=sflag, size = 0x8, scoped, tag = 'scoped memory for tpu_custom_call.1']
    #allocation5 [shape = 'u8[8192]{0}', space=vmem, size = 0x2000, scoped, tag = 'input window, operand 1']
    #allocation6 [shape = 's32[2]{0}', space=sflag, size = 0x8, scoped, tag = 'scoped memory for tpu_custom_call.1']
    #allocation7 [shape = 'u8[65536]{0}', space=vmem, size = 0x10000, scoped, tag = 'input window, operand 2, single buffered']
    #allocation8 [shape = 'u8[512]{0}', space=vmem, size = 0x400, scoped, tag = 'input window, operand 3, single buffered']
    #allocation9 [shape = 's32[1]{0}', space=sflag, size = 0x4, scoped, tag = 'scoped memory for tpu_custom_call.1']
    #allocation10 [shape = 'u8[65536]{0}', space=vmem, size = 0x10000, scoped, tag = 'input window, operand 4, single buffered']
    #allocation11 [shape = 'u8[512]{0}', space=vmem, size = 0x400, scoped, tag = 'input window, operand 5, single buffered']
    #allocation12 [shape = 's32[1]{0}', space=sflag, size = 0x4, scoped, tag = 'scoped memory for tpu_custom_call.1']
    #allocation13 [shape = 'u8[512]{0}', space=vmem, size = 0x400, scoped, tag = 'input window, operand 6, single buffered']
    #allocation14 [shape = 'u8[512]{0}', space=vmem, size = 0x400, scoped, tag = 'input window, operand 7, single buffered']
    #allocation15 [shape = 's32[1]{0}', space=sflag, size = 0x4, scoped, tag = 'scoped memory for tpu_custom_call.1']
    #allocation16 [shape = 'u8[8192]{0}', space=vmem, size = 0x2000, scoped, tag = 'output window, operand 0']
    %13 = vsyncpa [#allocation3], 0
    %s14 = scalar_lea.sflag [#allocation3], 1
    %15 = vsyncpa %s14, 0
    %16 = vsyncpa [#allocation6], 0
    %s17 = scalar_lea.sflag [#allocation6], 1
    %18 = vsyncpa %s17, 0
    %19 = vsyncpa [#allocation9], 0
    %20 = vsyncpa [#allocation12], 0
    %21 = vsyncpa [#allocation15], 0
    %22 = vsyncpa [#allocation4], 0
    %s23 = scalar_lea.sflag [#allocation4], 1
    %24 = vsyncpa %s23, 0
    loop: start=0, step=1, limit=4
    $region2: #{tpu_custom_call.1} parent=1 // loop_pre_header
      _
    $region3: #{tpu_custom_call.1} parent=1 // loop_header
      %s26 = sphi 0, %s30
      %p27 = scmp.ge.s32.totalorder %s26, 4
      %s36 = sphi 0, %s38
      %s39 = sphi 0, %s36
      %s40 = sphi 0, %s39
      %s56 = sphi 0, %s40
      %s62 = sphi 0, %s64
      %s65 = sphi 0, %s62
      %s66 = sphi 0, %s65
      %s82 = sphi 0, %s66
      %s86 = sphi 0, %s86
      %s88 = sphi 0, %s86
      %s89 = sphi 0, %s88
      %s103 = sphi 0, %s89
      %s107 = sphi 0, %s107
      %s109 = sphi 0, %s107
      %s110 = sphi 0, %s109
      %s124 = sphi 0, %s110
      %s128 = sphi 0, %s128
      %s130 = sphi 0, %s128
      %s131 = sphi 0, %s130
      %s145 = sphi 0, %s131
      %s149 = sphi 0, %s149
      %s151 = sphi 0, %s149
      %s152 = sphi 0, %s151
      %s166 = sphi 0, %s152
      %s170 = sphi 0, %s170
      %s172 = sphi 0, %s170
      %s173 = sphi 0, %s172
      %s187 = sphi 0, %s173
      %s191 = sphi 0, %s191
      %s193 = sphi 0, %s191
      %s194 = sphi 0, %s193
      %s208 = sphi 0, %s194
      %s214 = sphi 0, %s216
      %s217 = sphi 0, %s214
      %s218 = sphi 0, %s217
      %s234 = sphi 0, %s218
    $region4: #{tpu_custom_call.1} parent=1 // loop_header_branch
      %29 = sbr.rel (%p27) target = $region8
    $region5: #{tpu_custom_call.1} parent=1 // loop_body
      %s31 = ssub.s32 %s26, 1
      %s32 = ssub.s32 %s26, 2
      %s33 = sadd.s32 %s26, 1
      %s34 = ssub.s32 %s26, %s33
      %p35 = scmp.eq.s32.totalorder %s34, 0
      %s37 = sadd.s32 %s36, 1
      %s38 = scalar_select %p35, %s36, %s37
      %p41 = pneg %p35
      %p42 = scmp.eq.s32.totalorder %s26, 1
      %p43 = por %p41, %p42
      %p44 = scmp.ne.s32.totalorder %s36, %s39
      %p45 = scmp.eq.s32.totalorder %s26, 0
      %p46 = por %p44, %p45
      %p47 = scmp.ne.s32.totalorder %s36, %s39
      %p48 = scmp.eq.s32.totalorder %s31, 1
      %p49 = por %p47, %p48
      %p50 = scmp.ne.s32.totalorder %s39, %s40
      %p51 = scmp.eq.s32.totalorder %s31, 0
      %p52 = por %p50, %p51
      %p53 = scmp.ne.s32.totalorder %s39, %s40
      %p54 = scmp.eq.s32.totalorder %s32, 1
      %p55 = por %p53, %p54
      %p57 = scmp.ne.s32.totalorder %s40, %s56
      %p58 = scmp.eq.s32.totalorder %s32, 0
      %p59 = por %p57, %p58
      %s60 = ssub.s32 %s26, %s33
      %p61 = scmp.eq.s32.totalorder %s60, 0
      %s63 = sadd.s32 %s62, 1
      %s64 = scalar_select %p61, %s62, %s63
      %p67 = pneg %p61
      %p68 = scmp.eq.s32.totalorder %s26, 1
      %p69 = por %p67, %p68
      %p70 = scmp.ne.s32.totalorder %s62, %s65
      %p71 = scmp.eq.s32.totalorder %s26, 0
      %p72 = por %p70, %p71
      %p73 = scmp.ne.s32.totalorder %s62, %s65
      %p74 = scmp.eq.s32.totalorder %s31, 1
      %p75 = por %p73, %p74
      %p76 = scmp.ne.s32.totalorder %s65, %s66
      %p77 = scmp.eq.s32.totalorder %s31, 0
      %p78 = por %p76, %p77
      %p79 = scmp.ne.s32.totalorder %s65, %s66
      %p80 = scmp.eq.s32.totalorder %s32, 1
      %p81 = por %p79, %p80
      %p83 = scmp.ne.s32.totalorder %s66, %s82
      %p84 = scmp.eq.s32.totalorder %s32, 0
      %p85 = por %p83, %p84
      %s87 = sadd.s32 %s86, 1
      %p90 = scmp.eq.s32.totalorder %s26, 1
      %p91 = scmp.ne.s32.totalorder %s86, %s88
      %p92 = scmp.eq.s32.totalorder %s26, 0
      %p93 = por %p91, %p92
      %p94 = scmp.ne.s32.totalorder %s86, %s88
      %p95 = scmp.eq.s32.totalorder %s31, 1
      %p96 = por %p94, %p95
      %p97 = scmp.ne.s32.totalorder %s88, %s89
      %p98 = scmp.eq.s32.totalorder %s31, 0
      %p99 = por %p97, %p98
      %p100 = scmp.ne.s32.totalorder %s88, %s89
      %p101 = scmp.eq.s32.totalorder %s32, 1
      %p102 = por %p100, %p101
      %p104 = scmp.ne.s32.totalorder %s89, %s103
      %p105 = scmp.eq.s32.totalorder %s32, 0
      %p106 = por %p104, %p105
      %s108 = sadd.s32 %s107, 1
      %p111 = scmp.eq.s32.totalorder %s26, 1
      %p112 = scmp.ne.s32.totalorder %s107, %s109
      %p113 = scmp.eq.s32.totalorder %s26, 0
      %p114 = por %p112, %p113
      %p115 = scmp.ne.s32.totalorder %s107, %s109
      %p116 = scmp.eq.s32.totalorder %s31, 1
      %p117 = por %p115, %p116
      %p118 = scmp.ne.s32.totalorder %s109, %s110
      %p119 = scmp.eq.s32.totalorder %s31, 0
      %p120 = por %p118, %p119
      %p121 = scmp.ne.s32.totalorder %s109, %s110
      %p122 = scmp.eq.s32.totalorder %s32, 1
      %p123 = por %p121, %p122
      %p125 = scmp.ne.s32.totalorder %s110, %s124
      %p126 = scmp.eq.s32.totalorder %s32, 0
      %p127 = por %p125, %p126
      %s129 = sadd.s32 %s128, 1
      %p132 = scmp.eq.s32.totalorder %s26, 1
      %p133 = scmp.ne.s32.totalorder %s128, %s130
      %p134 = scmp.eq.s32.totalorder %s26, 0
      %p135 = por %p133, %p134
      %p136 = scmp.ne.s32.totalorder %s128, %s130
      %p137 = scmp.eq.s32.totalorder %s31, 1
      %p138 = por %p136, %p137
      %p139 = scmp.ne.s32.totalorder %s130, %s131
      %p140 = scmp.eq.s32.totalorder %s31, 0
      %p141 = por %p139, %p140
      %p142 = scmp.ne.s32.totalorder %s130, %s131
      %p143 = scmp.eq.s32.totalorder %s32, 1
      %p144 = por %p142, %p143
      %p146 = scmp.ne.s32.totalorder %s131, %s145
      %p147 = scmp.eq.s32.totalorder %s32, 0
      %p148 = por %p146, %p147
      %s150 = sadd.s32 %s149, 1
      %p153 = scmp.eq.s32.totalorder %s26, 1
      %p154 = scmp.ne.s32.totalorder %s149, %s151
      %p155 = scmp.eq.s32.totalorder %s26, 0
      %p156 = por %p154, %p155
      %p157 = scmp.ne.s32.totalorder %s149, %s151
      %p158 = scmp.eq.s32.totalorder %s31, 1
      %p159 = por %p157, %p158
      %p160 = scmp.ne.s32.totalorder %s151, %s152
      %p161 = scmp.eq.s32.totalorder %s31, 0
      %p162 = por %p160, %p161
      %p163 = scmp.ne.s32.totalorder %s151, %s152
      %p164 = scmp.eq.s32.totalorder %s32, 1
      %p165 = por %p163, %p164
      %p167 = scmp.ne.s32.totalorder %s152, %s166
      %p168 = scmp.eq.s32.totalorder %s32, 0
      %p169 = por %p167, %p168
      %s171 = sadd.s32 %s170, 1
      %p174 = scmp.eq.s32.totalorder %s26, 1
      %p175 = scmp.ne.s32.totalorder %s170, %s172
      %p176 = scmp.eq.s32.totalorder %s26, 0
      %p177 = por %p175, %p176
      %p178 = scmp.ne.s32.totalorder %s170, %s172
      %p179 = scmp.eq.s32.totalorder %s31, 1
      %p180 = por %p178, %p179
      %p181 = scmp.ne.s32.totalorder %s172, %s173
      %p182 = scmp.eq.s32.totalorder %s31, 0
      %p183 = por %p181, %p182
      %p184 = scmp.ne.s32.totalorder %s172, %s173
      %p185 = scmp.eq.s32.totalorder %s32, 1
      %p186 = por %p184, %p185
      %p188 = scmp.ne.s32.totalorder %s173, %s187
      %p189 = scmp.eq.s32.totalorder %s32, 0
      %p190 = por %p188, %p189
      %s192 = sadd.s32 %s191, 1
      %p195 = scmp.eq.s32.totalorder %s26, 1
      %p196 = scmp.ne.s32.totalorder %s191, %s193
      %p197 = scmp.eq.s32.totalorder %s26, 0
      %p198 = por %p196, %p197
      %p199 = scmp.ne.s32.totalorder %s191, %s193
      %p200 = scmp.eq.s32.totalorder %s31, 1
      %p201 = por %p199, %p200
      %p202 = scmp.ne.s32.totalorder %s193, %s194
      %p203 = scmp.eq.s32.totalorder %s31, 0
      %p204 = por %p202, %p203
      %p205 = scmp.ne.s32.totalorder %s193, %s194
      %p206 = scmp.eq.s32.totalorder %s32, 1
      %p207 = por %p205, %p206
      %p209 = scmp.ne.s32.totalorder %s194, %s208
      %p210 = scmp.eq.s32.totalorder %s32, 0
      %p211 = por %p209, %p210
      %s212 = ssub.s32 %s26, %s33
      %p213 = scmp.eq.s32.totalorder %s212, 0
      %s215 = sadd.s32 %s214, 1
      %s216 = scalar_select %p213, %s214, %s215
      %p219 = pneg %p213
      %p220 = scmp.eq.s32.totalorder %s26, 1
      %p221 = por %p219, %p220
      %p222 = scmp.ne.s32.totalorder %s214, %s217
      %p223 = scmp.eq.s32.totalorder %s26, 0
      %p224 = por %p222, %p223
      %p225 = scmp.ne.s32.totalorder %s214, %s217
      %p226 = scmp.eq.s32.totalorder %s31, 1
      %p227 = por %p225, %p226
      %p228 = scmp.ne.s32.totalorder %s217, %s218
      %p229 = scmp.eq.s32.totalorder %s31, 0
      %p230 = por %p228, %p229
      %p231 = scmp.ne.s32.totalorder %s217, %s218
      %p232 = scmp.eq.s32.totalorder %s32, 1
      %p233 = por %p231, %p232
      %p235 = scmp.ne.s32.totalorder %s218, %s234
      %p236 = scmp.eq.s32.totalorder %s32, 0
      %p237 = por %p235, %p236
      %p238 = scmp.le.s32.totalorder 1, %s26
      %p239 = scmp.lt.s32.totalorder %s26, 3
      %p240 = pnand %p238, %p239
      %p241 = pneg %p240
      // Predicated region
      $region9: #{tpu_custom_call.1} parent=5 // pred_check
        _
      $region10: #{tpu_custom_call.1} parent=5 // pred_check_branch
        %243 = sbr.rel (%p240) target = $region12
      $region11: #{tpu_custom_call.1} parent=5 // pred_region
        %s244 = ssub.s32 %s26, 1
        // Predicated region
        $region13: #{tpu_custom_call.1} parent=11 // pred_check
          %p245 = pneg %p99
        $region14: #{tpu_custom_call.1} parent=11 // pred_check_branch
          %247 = sbr.rel (%p245) target = $region16
        $region15: #{tpu_custom_call.1} parent=11 // pred_region
          %s249 = ssub.s32 2048, 2048
          %250 = vsyncadd [#allocation6], %s249
          %s251 = sshll.u32 [#allocation7], 4
          %s252 = int_to_ptr.vmem [resolvable:$true] %s251
          %257 = dma.hbm_to_vmem [thread:$0]  %s2, 2048, %s252, [#allocation6], 128, 128, 8
        $region16: #{tpu_custom_call.1} parent=11 // pred_fallthru
          _
        // Predicated region
        $region17: #{tpu_custom_call.1} parent=11 // pred_check
          %p258 = pneg %p120
        $region18: #{tpu_custom_call.1} parent=11 // pred_check_branch
          %260 = sbr.rel (%p258) target = $region20
        $region19: #{tpu_custom_call.1} parent=11 // pred_region
          %s262 = ssub.s32 16, 16
          %263 = vsyncadd [#allocation9], %s262
          %s265 = sshll.u32 [#allocation8], 4
          %s266 = int_to_ptr.vmem [resolvable:$true] %s265
          %268 = dma.hbm_to_vmem [thread:$0]  %s3, 16, %s266, [#allocation9]
        $region20: #{tpu_custom_call.1} parent=11 // pred_fallthru
          _
        // Predicated region
        $region21: #{tpu_custom_call.1} parent=11 // pred_check
          %p269 = pneg %p141
        $region22: #{tpu_custom_call.1} parent=11 // pred_check_branch
          %271 = sbr.rel (%p269) target = $region24
        $region23: #{tpu_custom_call.1} parent=11 // pred_region
          %s273 = ssub.s32 2048, 2048
          %274 = vsyncadd [#allocation9], %s273
          %s275 = sshll.u32 [#allocation10], 4
          %s276 = int_to_ptr.vmem [resolvable:$true] %s275
          %281 = dma.hbm_to_vmem [thread:$0]  %s4, 2048, %s276, [#allocation9], 128, 128, 8
        $region24: #{tpu_custom_call.1} parent=11 // pred_fallthru
          _
        // Predicated region
        $region25: #{tpu_custom_call.1} parent=11 // pred_check
          %p282 = pneg %p162
        $region26: #{tpu_custom_call.1} parent=11 // pred_check_branch
          %284 = sbr.rel (%p282) target = $region28
        $region27: #{tpu_custom_call.1} parent=11 // pred_region
          %s286 = ssub.s32 16, 16
          %287 = vsyncadd [#allocation12], %s286
          %s289 = sshll.u32 [#allocation11], 4
          %s290 = int_to_ptr.vmem [resolvable:$true] %s289
          %292 = dma.hbm_to_vmem [thread:$0]  %s5, 16, %s290, [#allocation12]
        $region28: #{tpu_custom_call.1} parent=11 // pred_fallthru
          _
        // Predicated region
        $region29: #{tpu_custom_call.1} parent=11 // pred_check
          %p293 = pneg %p183
        $region30: #{tpu_custom_call.1} parent=11 // pred_check_branch
          %295 = sbr.rel (%p293) target = $region32
        $region31: #{tpu_custom_call.1} parent=11 // pred_region
          %s297 = ssub.s32 16, 16
          %298 = vsyncadd [#allocation12], %s297
          %s300 = sshll.u32 [#allocation13], 4
          %s301 = int_to_ptr.vmem [resolvable:$true] %s300
          %303 = dma.hbm_to_vmem [thread:$0]  %s6, 16, %s301, [#allocation12]
        $region32: #{tpu_custom_call.1} parent=11 // pred_fallthru
          _
        // Predicated region
        $region33: #{tpu_custom_call.1} parent=11 // pred_check
          %p304 = pneg %p204
        $region34: #{tpu_custom_call.1} parent=11 // pred_check_branch
          %306 = sbr.rel (%p304) target = $region36
        $region35: #{tpu_custom_call.1} parent=11 // pred_region
          %s308 = ssub.s32 16, 16
          %309 = vsyncadd [#allocation15], %s308
          %s311 = sshll.u32 [#allocation14], 4
          %s312 = int_to_ptr.vmem [resolvable:$true] %s311
          %314 = dma.hbm_to_vmem [thread:$0]  %s7, 16, %s312, [#allocation15]
        $region36: #{tpu_custom_call.1} parent=11 // pred_fallthru
          _
      $region12: #{tpu_custom_call.1} parent=5 // pred_fallthru
        _
      %p315 = scmp.lt.s32.totalorder %s26, 2
      // Predicated region
      $region37: #{tpu_custom_call.1} parent=5 // pred_check
        %p316 = pneg %p315
      $region38: #{tpu_custom_call.1} parent=5 // pred_check_branch
        %318 = sbr.rel (%p316) target = $region40
      $region39: #{tpu_custom_call.1} parent=5 // pred_region
        // Predicated region
        $region41: #{tpu_custom_call.1} parent=39 // pred_check
          %p319 = pneg %p46
        $region42: #{tpu_custom_call.1} parent=39 // pred_check_branch
          %321 = sbr.rel (%p319) target = $region44
        $region43: #{tpu_custom_call.1} parent=39 // pred_region
          %s322 = sand.u32 %s36, 1
          %s323 = scalar_lea.sflag [#allocation3], %s322
          %s324 = sand.u32 %s36, 1
          %s325 = smul.addr %s324, 8
          %s326 = scalar_lea.vmem [#allocation2], %s325
          %s328 = ssub.s32 128, 128
          %329 = vsyncadd %s323, %s328
          %s330 = smul.addr %s26, 128
          %s331 = scalar_lea.hbm %s0, %s330
          %s333 = sshll.u32 %s326, 4
          %s334 = int_to_ptr.vmem [resolvable:$true] %s333
          %336 = dma.hbm_to_vmem [thread:$0]  %s331, 128, %s334, %s323
        $region44: #{tpu_custom_call.1} parent=39 // pred_fallthru
          _
        // Predicated region
        $region45: #{tpu_custom_call.1} parent=39 // pred_check
          %p337 = pneg %p72
        $region46: #{tpu_custom_call.1} parent=39 // pred_check_branch
          %339 = sbr.rel (%p337) target = $region48
        $region47: #{tpu_custom_call.1} parent=39 // pred_region
          %s340 = sand.u32 %s26, 1
          %s341 = scalar_lea.sflag [#allocation6], %s340
          %s342 = sand.u32 %s62, 1
          %s343 = smul.addr %s342, 8
          %s344 = scalar_lea.vmem [#allocation5], %s343
          %s346 = ssub.s32 128, 128
          %347 = vsyncadd %s341, %s346
          %s348 = smul.addr %s26, 128
          %s349 = scalar_lea.hbm %s1, %s348
          %s351 = sshll.u32 %s344, 4
          %s352 = int_to_ptr.vmem [resolvable:$true] %s351
          %354 = dma.hbm_to_vmem [thread:$0]  %s349, 128, %s352, %s341
        $region48: #{tpu_custom_call.1} parent=39 // pred_fallthru
          _
      $region40: #{tpu_custom_call.1} parent=5 // pred_fallthru
        _
      %p355 = scmp.le.s32.totalorder 1, %s26
      %p356 = scmp.lt.s32.totalorder %s26, 3
      %p357 = pnand %p355, %p356
      %p358 = pneg %p357
      // Predicated region
      $region49: #{tpu_custom_call.1} parent=5 // pred_check
        _
      $region50: #{tpu_custom_call.1} parent=5 // pred_check_branch
        %360 = sbr.rel (%p357) target = $region52
      $region51: #{tpu_custom_call.1} parent=5 // pred_region
        %s361 = ssub.s32 %s26, 1
        %s362 = sand.u32 %s39, 1
        %s363 = scalar_lea.sflag [#allocation3], %s362
        %s364 = sand.u32 %s39, 1
        %s365 = smul.addr %s364, 8
        %s366 = scalar_lea.vmem [#allocation2], %s365
        // Predicated region
        $region53: #{tpu_custom_call.1} parent=51 // pred_check
          %p367 = pneg %p52
        $region54: #{tpu_custom_call.1} parent=51 // pred_check_branch
          %369 = sbr.rel (%p367) target = $region56
        $region55: #{tpu_custom_call.1} parent=51 // pred_region
          %370 = dma.done %s363, 128
        $region56: #{tpu_custom_call.1} parent=51 // pred_fallthru
          _
        %s371 = sand.u32 %s31, 1
        %s372 = scalar_lea.sflag [#allocation6], %s371
        %s373 = sand.u32 %s65, 1
        %s374 = smul.addr %s373, 8
        %s375 = scalar_lea.vmem [#allocation5], %s374
        // Predicated region
        $region57: #{tpu_custom_call.1} parent=51 // pred_check
          %p376 = pneg %p78
        $region58: #{tpu_custom_call.1} parent=51 // pred_check_branch
          %378 = sbr.rel (%p376) target = $region60
        $region59: #{tpu_custom_call.1} parent=51 // pred_region
          %379 = dma.done %s372, 128
        $region60: #{tpu_custom_call.1} parent=51 // pred_fallthru
          _
        // Predicated region
        $region61: #{tpu_custom_call.1} parent=51 // pred_check
          %p380 = pneg %p99
        $region62: #{tpu_custom_call.1} parent=51 // pred_check_branch
          %382 = sbr.rel (%p380) target = $region64
        $region63: #{tpu_custom_call.1} parent=51 // pred_region
          %383 = dma.done [#allocation6], 2048
        $region64: #{tpu_custom_call.1} parent=51 // pred_fallthru
          _
        // Predicated region
        $region65: #{tpu_custom_call.1} parent=51 // pred_check
          %p384 = pneg %p120
        $region66: #{tpu_custom_call.1} parent=51 // pred_check_branch
          %386 = sbr.rel (%p384) target = $region68
        $region67: #{tpu_custom_call.1} parent=51 // pred_region
          %387 = dma.done [#allocation9], 16
        $region68: #{tpu_custom_call.1} parent=51 // pred_fallthru
          _
        // Predicated region
        $region69: #{tpu_custom_call.1} parent=51 // pred_check
          %p388 = pneg %p141
        $region70: #{tpu_custom_call.1} parent=51 // pred_check_branch
          %390 = sbr.rel (%p388) target = $region72
        $region71: #{tpu_custom_call.1} parent=51 // pred_region
          %391 = dma.done [#allocation9], 2048
        $region72: #{tpu_custom_call.1} parent=51 // pred_fallthru
          _
        // Predicated region
        $region73: #{tpu_custom_call.1} parent=51 // pred_check
          %p392 = pneg %p162
        $region74: #{tpu_custom_call.1} parent=51 // pred_check_branch
          %394 = sbr.rel (%p392) target = $region76
        $region75: #{tpu_custom_call.1} parent=51 // pred_region
          %395 = dma.done [#allocation12], 16
        $region76: #{tpu_custom_call.1} parent=51 // pred_fallthru
          _
        // Predicated region
        $region77: #{tpu_custom_call.1} parent=51 // pred_check
          %p396 = pneg %p183
        $region78: #{tpu_custom_call.1} parent=51 // pred_check_branch
          %398 = sbr.rel (%p396) target = $region80
        $region79: #{tpu_custom_call.1} parent=51 // pred_region
          %399 = dma.done [#allocation12], 16
        $region80: #{tpu_custom_call.1} parent=51 // pred_fallthru
          _
        // Predicated region
        $region81: #{tpu_custom_call.1} parent=51 // pred_check
          %p400 = pneg %p204
        $region82: #{tpu_custom_call.1} parent=51 // pred_check_branch
          %402 = sbr.rel (%p400) target = $region84
        $region83: #{tpu_custom_call.1} parent=51 // pred_region
          %403 = dma.done [#allocation15], 16
        $region84: #{tpu_custom_call.1} parent=51 // pred_fallthru
          _
        %s404 = sand.u32 %s39, 1
        %s405 = scalar_lea.sflag [#allocation3], %s404
        %s406 = sand.u32 %s39, 1
        %s407 = smul.addr %s406, 8
        %s408 = scalar_lea.vmem [#allocation2], %s407
        %p409 = pneg %p52
        %p410 = pneg %p49
        %s411 = sand.u32 %s31, 1
        %s412 = scalar_lea.sflag [#allocation6], %s411
        %s413 = sand.u32 %s65, 1
        %s414 = smul.addr %s413, 8
        %s415 = scalar_lea.vmem [#allocation5], %s414
        %p416 = pneg %p78
        %p417 = pneg %p75
        %p418 = pneg %p99
        %p419 = pneg %p96
        %p420 = pneg %p120
        %p421 = pneg %p117
        %p422 = pneg %p141
        %p423 = pneg %p138
        %p424 = pneg %p162
        %p425 = pneg %p159
        %p426 = pneg %p183
        %p427 = pneg %p180
        %p428 = pneg %p204
        %p429 = pneg %p201
        %p430 = pneg %p230
        %p431 = pneg %p227
        %s432 = sand.u32 %s217, 1
        %s433 = scalar_lea.sflag [#allocation4], %s432
        %s434 = sand.u32 %s217, 1
        %s435 = smul.addr %s434, 8
        %s436 = scalar_lea.vmem [#allocation16], %s435
        %v437 = vld [vmem:[%s366] sm:$0xff]
        %v438 = vld [vmem:[%s375] sm:$0xff]
        %v439 = vld [vmem:[#allocation7] sm:$0xff]
        %v440 = vld [vmem:[#allocation7 + $0x8] sm:$0xff]
        %v441 = vld [vmem:[#allocation7 + $0x10] sm:$0xff]
        %v442 = vld [vmem:[#allocation7 + $0x18] sm:$0xff]
        %v443 = vld [vmem:[#allocation7 + $0x20] sm:$0xff]
        %v444 = vld [vmem:[#allocation7 + $0x28] sm:$0xff]
        %v445 = vld [vmem:[#allocation7 + $0x30] sm:$0xff]
        %v446 = vld [vmem:[#allocation7 + $0x38] sm:$0xff]
        %v447 = vld [vmem:[#allocation7 + $0x40] sm:$0xff]
        %v448 = vld [vmem:[#allocation7 + $0x48] sm:$0xff]
        %v449 = vld [vmem:[#allocation7 + $0x50] sm:$0xff]
        %v450 = vld [vmem:[#allocation7 + $0x58] sm:$0xff]
        %v451 = vld [vmem:[#allocation7 + $0x60] sm:$0xff]
        %v452 = vld [vmem:[#allocation7 + $0x68] sm:$0xff]
        %v453 = vld [vmem:[#allocation7 + $0x70] sm:$0xff]
        %v454 = vld [vmem:[#allocation7 + $0x78] sm:$0xff]
        %v455 = vld [vmem:[#allocation8] sm:$0x1]
        %v457 = vlaneseq
        %v458 = vshrl.u32 %v457, 7
        %v459 = vsub.s32 0, %v458
        %v460 = vrot.slane %v455, %v459
        %462 = vmatprep.subr.mxu0 0.0
        %463 = vmatpush1.msra.mxu0 %v439
        %464 = vmatprep.subr.mxu0 0.0
        %465 = vmatpush1.msra.mxu0 %v440
        %466 = vmatprep.subr.mxu0 0.0
        %467 = vmatpush1.msra.mxu0 %v441
        %468 = vmatprep.subr.mxu0 0.0
        %469 = vmatpush1.msra.mxu0 %v442
        %470 = vmatprep.subr.mxu0 0.0
        %471 = vmatpush1.msra.mxu0 %v443
        %472 = vmatprep.subr.mxu0 0.0
        %473 = vmatpush1.msra.mxu0 %v444
        %474 = vmatprep.subr.mxu0 0.0
        %475 = vmatpush1.msra.mxu0 %v445
        %476 = vmatprep.subr.mxu0 0.0
        %477 = vmatpush1.msra.mxu0 %v446
        %478 = vmatprep.subr.mxu0 0.0
        %479 = vmatpush1.msra.mxu0 %v447
        %480 = vmatprep.subr.mxu0 0.0
        %481 = vmatpush1.msra.mxu0 %v448
        %482 = vmatprep.subr.mxu0 0.0
        %483 = vmatpush1.msra.mxu0 %v449
        %484 = vmatprep.subr.mxu0 0.0
        %485 = vmatpush1.msra.mxu0 %v450
        %486 = vmatprep.subr.mxu0 0.0
        %487 = vmatpush1.msra.mxu0 %v451
        %488 = vmatprep.subr.mxu0 0.0
        %489 = vmatpush1.msra.mxu0 %v452
        %490 = vmatprep.subr.mxu0 0.0
        %491 = vmatpush1.msra.mxu0 %v453
        %492 = vmatprep.subr.mxu0 0.0
        %493 = vmatpush1.msra.mxu0 %v454
        %494 = vmatprep.subr.mxu0 0.0
        %495 = vmatpush1.msra.mxu0 0.0
        %496 = vmatprep.subr.mxu0 0.0
        %497 = vmatpush1.msra.mxu0 0.0
        %498 = vmatprep.subr.mxu0 0.0
        %499 = vmatpush1.msra.mxu0 0.0
        %500 = vmatprep.subr.mxu0 0.0
        %501 = vmatpush1.msra.mxu0 0.0
        %502 = vmatprep.subr.mxu0 0.0
        %503 = vmatpush1.msra.mxu0 0.0
        %504 = vmatprep.subr.mxu0 0.0
        %505 = vmatpush1.msra.mxu0 0.0
        %506 = vmatprep.subr.mxu0 0.0
        %507 = vmatpush1.msra.mxu0 0.0
        %508 = vmatprep.subr.mxu0 0.0
        %509 = vmatpush1.msra.mxu0 0.0
        %510 = vmatprep.subr.mxu0 0.0
        %511 = vmatpush1.msra.mxu0 0.0
        %512 = vmatprep.subr.mxu0 0.0
        %513 = vmatpush1.msra.mxu0 0.0
        %514 = vmatprep.subr.mxu0 0.0
        %515 = vmatpush1.msra.mxu0 0.0
        %516 = vmatprep.subr.mxu0 0.0
        %517 = vmatpush1.msra.mxu0 0.0
        %518 = vmatprep.subr.mxu0 0.0
        %519 = vmatpush1.msra.mxu0 0.0
        %520 = vmatprep.subr.mxu0 0.0
        %521 = vmatpush1.msra.mxu0 0.0
        %522 = vmatprep.subr.mxu0 0.0
        %523 = vmatpush1.msra.mxu0 0.0
        %524 = vmatprep.subr.mxu0 0.0
        %525 = vmatpush1.msra.mxu0 0.0
        %526 = vmatprep.mubr.f32.mxu0 0.0
        %527 = vmatmul.mubr.f32.gmra.mrb[0].mxu0 %v438
        %v528 = vpop.f32.mrb[0].mxu0
        %v529 = vadd.f32 %v460, %v528
        %v530 = vpop.f32.mrb[0].mxu0
        %531 = vdwg.mxu0
        %v532 = vld [vmem:[#allocation10] sm:$0xff]
        %v533 = vld [vmem:[#allocation10 + $0x8] sm:$0xff]
        %v534 = vld [vmem:[#allocation10 + $0x10] sm:$0xff]
        %v535 = vld [vmem:[#allocation10 + $0x18] sm:$0xff]
        %v536 = vld [vmem:[#allocation10 + $0x20] sm:$0xff]
        %v537 = vld [vmem:[#allocation10 + $0x28] sm:$0xff]
        %v538 = vld [vmem:[#allocation10 + $0x30] sm:$0xff]
        %v539 = vld [vmem:[#allocation10 + $0x38] sm:$0xff]
        %v540 = vld [vmem:[#allocation10 + $0x40] sm:$0xff]
        %v541 = vld [vmem:[#allocation10 + $0x48] sm:$0xff]
        %v542 = vld [vmem:[#allocation10 + $0x50] sm:$0xff]
        %v543 = vld [vmem:[#allocation10 + $0x58] sm:$0xff]
        %v544 = vld [vmem:[#allocation10 + $0x60] sm:$0xff]
        %v545 = vld [vmem:[#allocation10 + $0x68] sm:$0xff]
        %v546 = vld [vmem:[#allocation10 + $0x70] sm:$0xff]
        %v547 = vld [vmem:[#allocation10 + $0x78] sm:$0xff]
        %v548 = vld [vmem:[#allocation11] sm:$0x1]
        %v550 = vlaneseq
        %v551 = vshrl.u32 %v550, 7
        %v552 = vsub.s32 0, %v551
        %v553 = vrot.slane %v548, %v552
        %555 = vmatprep.subr.mxu0 0.0
        %556 = vmatpush1.msra.mxu0 %v532
        %557 = vmatprep.subr.mxu0 0.0
        %558 = vmatpush1.msra.mxu0 %v533
        %559 = vmatprep.subr.mxu0 0.0
        %560 = vmatpush1.msra.mxu0 %v534
        %561 = vmatprep.subr.mxu0 0.0
        %562 = vmatpush1.msra.mxu0 %v535
        %563 = vmatprep.subr.mxu0 0.0
        %564 = vmatpush1.msra.mxu0 %v536
        %565 = vmatprep.subr.mxu0 0.0
        %566 = vmatpush1.msra.mxu0 %v537
        %567 = vmatprep.subr.mxu0 0.0
        %568 = vmatpush1.msra.mxu0 %v538
        %569 = vmatprep.subr.mxu0 0.0
        %570 = vmatpush1.msra.mxu0 %v539
        %571 = vmatprep.subr.mxu0 0.0
        %572 = vmatpush1.msra.mxu0 %v540
        %573 = vmatprep.subr.mxu0 0.0
        %574 = vmatpush1.msra.mxu0 %v541
        %575 = vmatprep.subr.mxu0 0.0
        %576 = vmatpush1.msra.mxu0 %v542
        %577 = vmatprep.subr.mxu0 0.0
        %578 = vmatpush1.msra.mxu0 %v543
        %579 = vmatprep.subr.mxu0 0.0
        %580 = vmatpush1.msra.mxu0 %v544
        %581 = vmatprep.subr.mxu0 0.0
        %582 = vmatpush1.msra.mxu0 %v545
        %583 = vmatprep.subr.mxu0 0.0
        %584 = vmatpush1.msra.mxu0 %v546
        %585 = vmatprep.subr.mxu0 0.0
        %586 = vmatpush1.msra.mxu0 %v547
        %587 = vmatprep.subr.mxu0 0.0
        %588 = vmatpush1.msra.mxu0 0.0
        %589 = vmatprep.subr.mxu0 0.0
        %590 = vmatpush1.msra.mxu0 0.0
        %591 = vmatprep.subr.mxu0 0.0
        %592 = vmatpush1.msra.mxu0 0.0
        %593 = vmatprep.subr.mxu0 0.0
        %594 = vmatpush1.msra.mxu0 0.0
        %595 = vmatprep.subr.mxu0 0.0
        %596 = vmatpush1.msra.mxu0 0.0
        %597 = vmatprep.subr.mxu0 0.0
        %598 = vmatpush1.msra.mxu0 0.0
        %599 = vmatprep.subr.mxu0 0.0
        %600 = vmatpush1.msra.mxu0 0.0
        %601 = vmatprep.subr.mxu0 0.0
        %602 = vmatpush1.msra.mxu0 0.0
        %603 = vmatprep.subr.mxu0 0.0
        %604 = vmatpush1.msra.mxu0 0.0
        %605 = vmatprep.subr.mxu0 0.0
        %606 = vmatpush1.msra.mxu0 0.0
        %607 = vmatprep.subr.mxu0 0.0
        %608 = vmatpush1.msra.mxu0 0.0
        %609 = vmatprep.subr.mxu0 0.0
        %610 = vmatpush1.msra.mxu0 0.0
        %611 = vmatprep.subr.mxu0 0.0
        %612 = vmatpush1.msra.mxu0 0.0
        %613 = vmatprep.subr.mxu0 0.0
        %614 = vmatpush1.msra.mxu0 0.0
        %615 = vmatprep.subr.mxu0 0.0
        %616 = vmatpush1.msra.mxu0 0.0
        %617 = vmatprep.subr.mxu0 0.0
        %618 = vmatpush1.msra.mxu0 0.0
        %619 = vmatprep.mubr.f32.mxu0 0.0
        %620 = vmatmul.mubr.f32.gmra.mrb[0].mxu0 %v529
        %v621 = vpop.f32.mrb[0].mxu0
        %v622 = vadd.f32 %v553, %v621
        %v623 = vpop.f32.mrb[0].mxu0
        %624 = vdwg.mxu0
        %v625 = vadd.f32 %v622, %v437
        %626 = vadd.xlane.f32.xlu0 %v625
        %v627 = vpop.xlane.xlu0 %626
        %v628 = vrcp.pop 128.0
        %v629 = vmul.f32 %v627, %v628
        %v630 = vsub.f32 %v625, %v629
        %v631 = vmul.f32 %v630, %v630
        %632 = vadd.xlane.f32.xlu0 %v631
        %v633 = vpop.xlane.xlu0 %632
        %v634 = vmul.f32 %v633, %v628
        %v635 = vadd.f32 %v634, 1e-05
        %v636 = vrsqrt.pop %v635
        %v637 = vmul.f32 %v630, %v636
        %v638 = vld [vmem:[#allocation13] sm:$0x1]
        %v640 = vlaneseq
        %v641 = vshrl.u32 %v640, 7
        %v642 = vsub.s32 0, %v641
        %v643 = vrot.slane %v638, %v642
        %v645 = vmul.f32 %v637, %v643
        %v646 = vld [vmem:[#allocation14] sm:$0x1]
        %v648 = vlaneseq
        %v649 = vshrl.u32 %v648, 7
        %v650 = vsub.s32 0, %v649
        %v651 = vrot.slane %v646, %v650
        %v653 = vadd.f32 %v645, %v651
        %654 = vst [vmem:[%s436] sm:$0xff] %v653
        %s655 = sand.u32 %s217, 1
        %s656 = scalar_lea.sflag [#allocation4], %s655
        %s657 = sand.u32 %s217, 1
        %s658 = smul.addr %s657, 8
        %s659 = scalar_lea.vmem [#allocation16], %s658
        // Predicated region
        $region85: #{tpu_custom_call.1} parent=51 // pred_check
          %p660 = pneg %p227
        $region86: #{tpu_custom_call.1} parent=51 // pred_check_branch
          %662 = sbr.rel (%p660) target = $region88
        $region87: #{tpu_custom_call.1} parent=51 // pred_region
          %s664 = ssub.s32 128, 128
          %665 = vsyncadd %s656, %s664
          %s666 = smul.addr %s31, 128
          %s667 = scalar_lea.hbm %s8, %s666
          %s669 = sshll.u32 %s659, 4
          %s670 = int_to_ptr.vmem [resolvable:$true] %s669
          %672 = dma.vmem_to_hbm [thread:$0]  %s670, 128, %s667, %s656
        $region88: #{tpu_custom_call.1} parent=51 // pred_fallthru
          _
      $region52: #{tpu_custom_call.1} parent=5 // pred_fallthru
        _
      %p673 = scmp.le.s32.totalorder 2, %s26
      // Predicated region
      $region89: #{tpu_custom_call.1} parent=5 // pred_check
        %p674 = pneg %p673
      $region90: #{tpu_custom_call.1} parent=5 // pred_check_branch
        %676 = sbr.rel (%p674) target = $region92
      $region91: #{tpu_custom_call.1} parent=5 // pred_region
        %s677 = ssub.s32 %s26, 2
        // Predicated region
        $region93: #{tpu_custom_call.1} parent=91 // pred_check
          %p678 = pneg %p233
        $region94: #{tpu_custom_call.1} parent=91 // pred_check_branch
          %680 = sbr.rel (%p678) target = $region96
        $region95: #{tpu_custom_call.1} parent=91 // pred_region
          %s681 = sand.u32 %s218, 1
          %s682 = scalar_lea.sflag [#allocation4], %s681
          %s683 = sand.u32 %s218, 1
          %s684 = smul.addr %s683, 8
          %s685 = scalar_lea.vmem [#allocation16], %s684
          %686 = dma.done %s682, 128
        $region96: #{tpu_custom_call.1} parent=91 // pred_fallthru
          _
      $region92: #{tpu_custom_call.1} parent=5 // pred_fallthru
        _
    $region6: #{tpu_custom_call.1} parent=1 // loop_footer
      %s30 = sadd.s32 1, %s26
    $region7: #{tpu_custom_call.1} parent=1 // loop_footer_branch
      %25 = sbr.rel target = $region3
    $region8: #{tpu_custom_call.1} parent=1 // loop_exit
      _
    %687 = vsyncpa [#allocation3], 1
    %s688 = scalar_lea.sflag [#allocation3], 1
    %689 = vsyncpa %s688, 1
    %690 = vsyncpa [#allocation6], 1
    %s691 = scalar_lea.sflag [#allocation6], 1
    %692 = vsyncpa %s691, 1
    %693 = vsyncpa [#allocation9], 1
    %694 = vsyncpa [#allocation12], 1
    %695 = vsyncpa [#allocation15], 1
    %696 = vsyncpa [#allocation4], 1
    %s697 = scalar_lea.sflag [#allocation4], 1
    %698 = vsyncpa %s697, 1

</llo_original>
